<compile_context>
chip_gen: v6e
topology: v6e:2x2x1
jax: 0.10.0
libtpu: 0.0.40
codegen_flags: <defaults>
</compile_context>

<pallas_src>
import jax
import jax.numpy as jnp
from jax.experimental import pallas as pl
from jax.experimental.pallas import tpu as pltpu


def conv1x1_kernel(w_ref, x_ref, o_ref):
    # w_ref: (C_out, C_in)  resident weight tile in VMEM
    # x_ref: (C_in, HW)     one batch image, channels-major (native NCHW view)
    # o_ref: (C_out, HW)    output tile in VMEM
    o_ref[...] = jnp.dot(
        w_ref[...], x_ref[...], preferred_element_type=jnp.float32
    ).astype(o_ref.dtype)


def conv2d_1x1(x_nchw: jax.Array, weight_oihw: jax.Array) -> jax.Array:
    """1x1 conv, stride 1, no bias. x: [N, C_in, H, W], weight: [C_out, C_in, 1, 1]."""
    N, C_in, H, W = x_nchw.shape
    C_out = weight_oihw.shape[0]
    HW = H * W

    # Pure reshapes (views) — no transposes, no extra HBM traffic.
    x3d = x_nchw.reshape(N, C_in, HW)           # (N, C_in, HW)
    w2d = weight_oihw.reshape(C_out, C_in)      # (C_out, C_in), no .T needed

    # Grid over batch only.  At the module's native shape (N=1, HW=196) the
    # whole problem is ~1.1 MB and latency/HBM bound, so no further tiling:
    # a pixel-axis split would only add per-step overhead.
    # TODO(synk): if this kernel is reused with much larger H*W (or batch),
    # add a "parallel" pixel-axis grid (tile multiple of 8) gated on size.
    out3d = pl.pallas_call(
        conv1x1_kernel,
        out_shape=jax.ShapeDtypeStruct((N, C_out, HW), x_nchw.dtype),
        grid_spec=pl.GridSpec(
            grid=(N,),
            in_specs=[
                # Weight stays resident across the (tiny) grid.
                pl.BlockSpec((C_out, C_in), lambda n: (0, 0)),
                # Per-batch image; leading batch dim squeezed out of the Ref.
                pl.BlockSpec((None, C_in, HW), lambda n: (n, 0, 0)),
            ],
            out_specs=pl.BlockSpec((None, C_out, HW), lambda n: (n, 0, 0)),
        ),
        compiler_params=pltpu.CompilerParams(
            dimension_semantics=("parallel",),
        ),
    )(w2d, x3d)

    # (N, C_out, HW) -> (N, C_out, H, W): another pure reshape, no transpose.
    return out3d.reshape(N, C_out, H, W)


if __name__ == "__main__":
    key = jax.random.PRNGKey(0)
    kx, kw = jax.random.split(key)

    # Shapes implied by the module's forward: x [1, 128, 14, 14] -> [1, 768, 14, 14]
    N, C_in, H, W = 1, 128, 14, 14
    C_out = 768

    x = jax.random.normal(kx, (N, C_in, H, W), dtype=jnp.float32)
    # Deterministic weight init (kaiming-uniform-like scale for a 1x1 conv).
    fan_in = C_in * 1 * 1
    bound = (1.0 / fan_in) ** 0.5
    weight = jax.random.uniform(
        kw, (C_out, C_in, 1, 1), dtype=jnp.float32, minval=-bound, maxval=bound
    )

    out = conv2d_1x1(x, weight)
    out = jax.block_until_ready(out)

    # Sanity check against a plain-JAX reference (1x1 conv == channel matmul).
    ref = jnp.einsum("nchw,oc->nohw", x, weight.reshape(C_out, C_in))
    assert out.shape == (N, C_out, H, W)
    assert jnp.allclose(out, ref, atol=1e-4, rtol=1e-4)

    print("KERNEL_OK")
</pallas_src>

<mosaic_0001>
module attributes {stable_mosaic.version = 11 : i64} {
  func.func @conv1x1_kernel(%arg0: i32, %arg1: memref<768x128xf32, #tpu.memory_space<vmem>>, %arg2: memref<1x128x196xf32, #tpu.memory_space<vmem>>, %arg3: memref<1x768x196xf32, #tpu.memory_space<vmem>>) attributes {dimension_semantics = [#tpu.dimension_semantics<parallel>], iteration_bounds = array<i64: 1>, scalar_prefetch = 0 : i64, scratch_operands = 0 : i64, tpu.core_type = #tpu.core_type<tc>, window_params = [{pipeline_mode = #tpu.pipeline_mode<synchronous>, transform_indices = @transform_0, window_bounds = array<i64: 768, 128>}, {transform_indices = @transform_1, window_bounds = array<i64: 1, 128, 196>}, {transform_indices = @transform_2, window_bounds = array<i64: 1, 768, 196>}]} {
    %c0 = arith.constant 0 : index
    %c0_0 = arith.constant 0 : index
    %0 = vector.load %arg1[%c0, %c0_0] : memref<768x128xf32, #tpu.memory_space<vmem>>, vector<768x128xf32>
    %c0_1 = arith.constant 0 : index
    %c0_2 = arith.constant 0 : index
    %c0_3 = arith.constant 0 : index
    %1 = vector.load %arg2[%c0_1, %c0_2, %c0_3] : memref<1x128x196xf32, #tpu.memory_space<vmem>>, vector<1x128x196xf32>
    %2 = vector.shape_cast %1 : vector<1x128x196xf32> to vector<128x196xf32>
    %cst = arith.constant dense<0.000000e+00> : vector<768x196xf32>
    %3 = tpu.matmul %0, %2, %cst {dimension_numbers = #tpu.dot_dimension_numbers<[1], [0], [0], [1], [0, 0, 1, 1], [], []>} : vector<768x128xf32>, vector<128x196xf32>, vector<768x196xf32> -> vector<768x196xf32>
    %c0_4 = arith.constant 0 : index
    %c0_5 = arith.constant 0 : index
    %c0_6 = arith.constant 0 : index
    %4 = vector.load %arg3[%c0_4, %c0_5, %c0_6] : memref<1x768x196xf32, #tpu.memory_space<vmem>>, vector<1x768x196xf32>
    %5 = vector.shape_cast %4 : vector<1x768x196xf32> to vector<768x196xf32>
    %6 = vector.shape_cast %3 : vector<768x196xf32> to vector<1x768x196xf32>
    tpu.vector_store %arg3[%c0_4, %c0_5, %c0_6], %6 {strides = array<i32>} : memref<1x768x196xf32, #tpu.memory_space<vmem>>, vector<1x768x196xf32>,
    return
  }
  func.func @transform_0(%arg0: i32) -> (i32, i32) {
    %c0_i32 = arith.constant 0 : i32
    %c0_i32_0 = arith.constant 0 : i32
    %c0_i32_1 = arith.constant 0 : i32
    return %c0_i32, %c0_i32_0 : i32, i32
  }
  func.func @transform_1(%arg0: i32) -> (i32, i32, i32) {
    %c0_i32 = arith.constant 0 : i32
    %c0_i32_0 = arith.constant 0 : i32
    %c0_i32_1 = arith.constant 0 : i32
    return %arg0, %c0_i32, %c0_i32_0 : i32, i32, i32
  }
  func.func @transform_2(%arg0: i32) -> (i32, i32, i32) {
    %c0_i32 = arith.constant 0 : i32
    %c0_i32_0 = arith.constant 0 : i32
    %c0_i32_1 = arith.constant 0 : i32
    return %arg0, %c0_i32, %c0_i32_0 : i32, i32, i32
  }
}

</mosaic_0001>

<llo_original>
// kernel: tpu_custom_call.1
$region0: #{tpu_custom_call.1}
  #allocation0 [shape = 'u32[]', space=smem, size = 0x4, offset = 0x4, fixed_abs, tag = 'smem constant byte address 0x4 - core index']
  #allocation1 [shape = 'u32[144,128]{1,0:T(1,128)}', space=vmem, size = 0x12000, scoped, tag = 'internal scratch']
  %s0 = inlined_call_operand.hbm [shape: f32[768,128], index: 0, kind: input, shape index: {}]
  %s1 = inlined_call_operand.vmem [shape: f32[1,128,196], index: 1, kind: input, shape index: {}]
  %s2 = inlined_call_operand.vmem [shape: f32[1,768,196], index: 2, kind: output, shape index: {}]
  %s3 = sld [smem:[#allocation0]]
  $region22: #{tpu_custom_call.1} parent=0
    _
  %s5 = ssub.s32 1, %s3
  %s6 = scalar_select 0, %s5, %s3
  $region1: #{tpu_custom_call.1} parent=0
    #allocation2 [shape = 'u8[393216]{0}', space=vmem, size = 0x60000, scoped, tag = 'input window, operand 0, single buffered']
    #allocation3 [shape = 's32[1]{0}', space=sflag, size = 0x4, scoped, tag = 'scoped memory for tpu_custom_call.1']
    %7 = vsyncpa [#allocation3], 0
    // Predicated region
    $region2: #{tpu_custom_call.1} parent=1 // pred_check
      _
    $region3: #{tpu_custom_call.1} parent=1 // pred_check_branch
      %9 = sbr.rel (0) target = $region5
    $region4: #{tpu_custom_call.1} parent=1 // pred_region
      %s11 = ssub.s32 12288, 12288
      %12 = vsyncadd [#allocation3], %s11
      %s13 = sshll.u32 [#allocation2], 4
      %s14 = int_to_ptr.vmem [resolvable:$true] %s13
      %19 = dma.hbm_to_vmem [thread:$0]  %s0, 12288, %s14, [#allocation3], 128, 128, 8
    $region5: #{tpu_custom_call.1} parent=1 // pred_fallthru
      _
    // Predicated region
    $region6: #{tpu_custom_call.1} parent=1 // pred_check
      _
    $region7: #{tpu_custom_call.1} parent=1 // pred_check_branch
      %21 = sbr.rel (0) target = $region9
    $region8: #{tpu_custom_call.1} parent=1 // pred_region
      _
    $region9: #{tpu_custom_call.1} parent=1 // pred_fallthru
      _
    // Predicated region
    $region10: #{tpu_custom_call.1} parent=1 // pred_check
      _
    $region11: #{tpu_custom_call.1} parent=1 // pred_check_branch
      %23 = sbr.rel (0) target = $region13
    $region12: #{tpu_custom_call.1} parent=1 // pred_region
      %24 = dma.done [#allocation3], 12288
    $region13: #{tpu_custom_call.1} parent=1 // pred_fallthru
      _
    %v25 = vld [vmem:[#allocation2] sm:$0xff]
    %v26 = vld [vmem:[#allocation2 + $0x8] sm:$0xff]
    %v27 = vld [vmem:[#allocation2 + $0x10] sm:$0xff]
    %v28 = vld [vmem:[#allocation2 + $0x18] sm:$0xff]
    %v29 = vld [vmem:[#allocation2 + $0x20] sm:$0xff]
    %v30 = vld [vmem:[#allocation2 + $0x28] sm:$0xff]
    %v31 = vld [vmem:[#allocation2 + $0x30] sm:$0xff]
    %v32 = vld [vmem:[#allocation2 + $0x38] sm:$0xff]
    %v33 = vld [vmem:[#allocation2 + $0x40] sm:$0xff]
    %v34 = vld [vmem:[#allocation2 + $0x48] sm:$0xff]
    %v35 = vld [vmem:[#allocation2 + $0x50] sm:$0xff]
    %v36 = vld [vmem:[#allocation2 + $0x58] sm:$0xff]
    %v37 = vld [vmem:[#allocation2 + $0x60] sm:$0xff]
    %v38 = vld [vmem:[#allocation2 + $0x68] sm:$0xff]
    %v39 = vld [vmem:[#allocation2 + $0x70] sm:$0xff]
    %v40 = vld [vmem:[#allocation2 + $0x78] sm:$0xff]
    %v41 = vld [vmem:[#allocation2 + $0x80] sm:$0xff]
    %v42 = vld [vmem:[#allocation2 + $0x88] sm:$0xff]
    %v43 = vld [vmem:[#allocation2 + $0x90] sm:$0xff]
    %v44 = vld [vmem:[#allocation2 + $0x98] sm:$0xff]
    %v45 = vld [vmem:[#allocation2 + $0xa0] sm:$0xff]
    %v46 = vld [vmem:[#allocation2 + $0xa8] sm:$0xff]
    %v47 = vld [vmem:[#allocation2 + $0xb0] sm:$0xff]
    %v48 = vld [vmem:[#allocation2 + $0xb8] sm:$0xff]
    %v49 = vld [vmem:[#allocation2 + $0xc0] sm:$0xff]
    %v50 = vld [vmem:[#allocation2 + $0xc8] sm:$0xff]
    %v51 = vld [vmem:[#allocation2 + $0xd0] sm:$0xff]
    %v52 = vld [vmem:[#allocation2 + $0xd8] sm:$0xff]
    %v53 = vld [vmem:[#allocation2 + $0xe0] sm:$0xff]
    %v54 = vld [vmem:[#allocation2 + $0xe8] sm:$0xff]
    %v55 = vld [vmem:[#allocation2 + $0xf0] sm:$0xff]
    %v56 = vld [vmem:[#allocation2 + $0xf8] sm:$0xff]
    %v57 = vld [vmem:[#allocation2 + $0x100] sm:$0xff]
    %v58 = vld [vmem:[#allocation2 + $0x108] sm:$0xff]
    %v59 = vld [vmem:[#allocation2 + $0x110] sm:$0xff]
    %v60 = vld [vmem:[#allocation2 + $0x118] sm:$0xff]
    %v61 = vld [vmem:[#allocation2 + $0x120] sm:$0xff]
    %v62 = vld [vmem:[#allocation2 + $0x128] sm:$0xff]
    %v63 = vld [vmem:[#allocation2 + $0x130] sm:$0xff]
    %v64 = vld [vmem:[#allocation2 + $0x138] sm:$0xff]
    %v65 = vld [vmem:[#allocation2 + $0x140] sm:$0xff]
    %v66 = vld [vmem:[#allocation2 + $0x148] sm:$0xff]
    %v67 = vld [vmem:[#allocation2 + $0x150] sm:$0xff]
    %v68 = vld [vmem:[#allocation2 + $0x158] sm:$0xff]
    %v69 = vld [vmem:[#allocation2 + $0x160] sm:$0xff]
    %v70 = vld [vmem:[#allocation2 + $0x168] sm:$0xff]
    %v71 = vld [vmem:[#allocation2 + $0x170] sm:$0xff]
    %v72 = vld [vmem:[#allocation2 + $0x178] sm:$0xff]
    %v73 = vld [vmem:[#allocation2 + $0x180] sm:$0xff]
    %v74 = vld [vmem:[#allocation2 + $0x188] sm:$0xff]
    %v75 = vld [vmem:[#allocation2 + $0x190] sm:$0xff]
    %v76 = vld [vmem:[#allocation2 + $0x198] sm:$0xff]
    %v77 = vld [vmem:[#allocation2 + $0x1a0] sm:$0xff]
    %v78 = vld [vmem:[#allocation2 + $0x1a8] sm:$0xff]
    %v79 = vld [vmem:[#allocation2 + $0x1b0] sm:$0xff]
    %v80 = vld [vmem:[#allocation2 + $0x1b8] sm:$0xff]
    %v81 = vld [vmem:[#allocation2 + $0x1c0] sm:$0xff]
    %v82 = vld [vmem:[#allocation2 + $0x1c8] sm:$0xff]
    %v83 = vld [vmem:[#allocation2 + $0x1d0] sm:$0xff]
    %v84 = vld [vmem:[#allocation2 + $0x1d8] sm:$0xff]
    %v85 = vld [vmem:[#allocation2 + $0x1e0] sm:$0xff]
    %v86 = vld [vmem:[#allocation2 + $0x1e8] sm:$0xff]
    %v87 = vld [vmem:[#allocation2 + $0x1f0] sm:$0xff]
    %v88 = vld [vmem:[#allocation2 + $0x1f8] sm:$0xff]
    %v89 = vld [vmem:[#allocation2 + $0x200] sm:$0xff]
    %v90 = vld [vmem:[#allocation2 + $0x208] sm:$0xff]
    %v91 = vld [vmem:[#allocation2 + $0x210] sm:$0xff]
    %v92 = vld [vmem:[#allocation2 + $0x218] sm:$0xff]
    %v93 = vld [vmem:[#allocation2 + $0x220] sm:$0xff]
    %v94 = vld [vmem:[#allocation2 + $0x228] sm:$0xff]
    %v95 = vld [vmem:[#allocation2 + $0x230] sm:$0xff]
    %v96 = vld [vmem:[#allocation2 + $0x238] sm:$0xff]
    %v97 = vld [vmem:[#allocation2 + $0x240] sm:$0xff]
    %v98 = vld [vmem:[#allocation2 + $0x248] sm:$0xff]
    %v99 = vld [vmem:[#allocation2 + $0x250] sm:$0xff]
    %v100 = vld [vmem:[#allocation2 + $0x258] sm:$0xff]
    %v101 = vld [vmem:[#allocation2 + $0x260] sm:$0xff]
    %v102 = vld [vmem:[#allocation2 + $0x268] sm:$0xff]
    %v103 = vld [vmem:[#allocation2 + $0x270] sm:$0xff]
    %v104 = vld [vmem:[#allocation2 + $0x278] sm:$0xff]
    %v105 = vld [vmem:[#allocation2 + $0x280] sm:$0xff]
    %v106 = vld [vmem:[#allocation2 + $0x288] sm:$0xff]
    %v107 = vld [vmem:[#allocation2 + $0x290] sm:$0xff]
    %v108 = vld [vmem:[#allocation2 + $0x298] sm:$0xff]
    %v109 = vld [vmem:[#allocation2 + $0x2a0] sm:$0xff]
    %v110 = vld [vmem:[#allocation2 + $0x2a8] sm:$0xff]
    %v111 = vld [vmem:[#allocation2 + $0x2b0] sm:$0xff]
    %v112 = vld [vmem:[#allocation2 + $0x2b8] sm:$0xff]
    %v113 = vld [vmem:[#allocation2 + $0x2c0] sm:$0xff]
    %v114 = vld [vmem:[#allocation2 + $0x2c8] sm:$0xff]
    %v115 = vld [vmem:[#allocation2 + $0x2d0] sm:$0xff]
    %v116 = vld [vmem:[#allocation2 + $0x2d8] sm:$0xff]
    %v117 = vld [vmem:[#allocation2 + $0x2e0] sm:$0xff]
    %v118 = vld [vmem:[#allocation2 + $0x2e8] sm:$0xff]
    %v119 = vld [vmem:[#allocation2 + $0x2f0] sm:$0xff]
    %v120 = vld [vmem:[#allocation2 + $0x2f8] sm:$0xff]
    %v121 = vld [vmem:[%s1] sm:$0xff]
    %v122 = vld [vmem:[%s1 + $0x8] sm:$0xff]
    %v123 = vld [vmem:[%s1 + $0x10] sm:$0xff]
    %v124 = vld [vmem:[%s1 + $0x18] sm:$0xff]
    %v125 = vld [vmem:[%s1 + $0x20] sm:$0xff]
    %v126 = vld [vmem:[%s1 + $0x28] sm:$0xff]
    %v127 = vld [vmem:[%s1 + $0x30] sm:$0xff]
    %v128 = vld [vmem:[%s1 + $0x38] sm:$0xff]
    %v129 = vld [vmem:[%s1 + $0x40] sm:$0xff]
    %v130 = vld [vmem:[%s1 + $0x48] sm:$0xff]
    %v131 = vld [vmem:[%s1 + $0x50] sm:$0xff]
    %v132 = vld [vmem:[%s1 + $0x58] sm:$0xff]
    %v133 = vld [vmem:[%s1 + $0x60] sm:$0xff]
    %v134 = vld [vmem:[%s1 + $0x68] sm:$0xff]
    %v135 = vld [vmem:[%s1 + $0x70] sm:$0xff]
    %v136 = vld [vmem:[%s1 + $0x78] sm:$0xff]
    %v137 = vld [vmem:[%s1 + $0x80] sm:$0xff]
    %v138 = vld [vmem:[%s1 + $0x88] sm:$0xff]
    %v139 = vld [vmem:[%s1 + $0x90] sm:$0xff]
    %v140 = vld [vmem:[%s1 + $0x98] sm:$0xff]
    %v141 = vld [vmem:[%s1 + $0xa0] sm:$0xff]
    %v142 = vld [vmem:[%s1 + $0xa8] sm:$0xff]
    %v143 = vld [vmem:[%s1 + $0xb0] sm:$0xff]
    %v144 = vld [vmem:[%s1 + $0xb8] sm:$0xff]
    %v145 = vld [vmem:[%s1 + $0xc0] sm:$0xff]
    %v146 = vld [vmem:[%s1 + $0xc8] sm:$0xff]
    %v147 = vld [vmem:[%s1 + $0xd0] sm:$0xff]
    %v148 = vld [vmem:[%s1 + $0xd8] sm:$0xff]
    %v149 = vld [vmem:[%s1 + $0xe0] sm:$0xff]
    %v150 = vld [vmem:[%s1 + $0xe8] sm:$0xff]
    %v151 = vld [vmem:[%s1 + $0xf0] sm:$0xff]
    %v152 = vld [vmem:[%s1 + $0xf8] sm:$0xff]
    %153 = vmatprep.subr.mxu0 %v152
    %154 = vmatpush1.msra.mxu0 %v151
    %155 = vmatprep.subr.mxu0 %v150
    %156 = vmatpush1.msra.mxu0 %v149
    %157 = vmatprep.subr.mxu0 %v148
    %158 = vmatpush1.msra.mxu0 %v147
    %159 = vmatprep.subr.mxu0 %v146
    %160 = vmatpush1.msra.mxu0 %v145
    %161 = vmatprep.subr.mxu0 %v144
    %162 = vmatpush1.msra.mxu0 %v143
    %163 = vmatprep.subr.mxu0 %v142
    %164 = vmatpush1.msra.mxu0 %v141
    %165 = vmatprep.subr.mxu0 %v140
    %166 = vmatpush1.msra.mxu0 %v139
    %167 = vmatprep.subr.mxu0 %v138
    %168 = vmatpush1.msra.mxu0 %v137
    %169 = vmatprep.subr.mxu0 %v136
    %170 = vmatpush1.msra.mxu0 %v135
    %171 = vmatprep.subr.mxu0 %v134
    %172 = vmatpush1.msra.mxu0 %v133
    %173 = vmatprep.subr.mxu0 %v132
    %174 = vmatpush1.msra.mxu0 %v131
    %175 = vmatprep.subr.mxu0 %v130
    %176 = vmatpush1.msra.mxu0 %v129
    %177 = vmatprep.subr.mxu0 %v128
    %178 = vmatpush1.msra.mxu0 %v127
    %179 = vmatprep.subr.mxu0 %v126
    %180 = vmatpush1.msra.mxu0 %v125
    %181 = vmatprep.subr.mxu0 %v124
    %182 = vmatpush1.msra.mxu0 %v123
    %183 = vmatprep.subr.mxu0 %v122
    %184 = vmatpush1.msra.mxu0 %v121
    %185 = vmatprep.subr.mxu0 0.0
    %186 = vmatpush2.msra.mxu0 0.0
    %187 = vmatprep.subr.mxu0 0.0
    %188 = vmatpush2.msra.mxu0 0.0
    %189 = vmatprep.subr.mxu0 0.0
    %190 = vmatpush2.msra.mxu0 0.0
    %191 = vmatprep.subr.mxu0 0.0
    %192 = vmatpush2.msra.mxu0 0.0
    %193 = vmatprep.subr.mxu0 0.0
    %194 = vmatpush2.msra.mxu0 0.0
    %195 = vmatprep.subr.mxu0 0.0
    %196 = vmatpush2.msra.mxu0 0.0
    %197 = vmatprep.subr.mxu0 0.0
    %198 = vmatpush2.msra.mxu0 0.0
    %199 = vmatprep.subr.mxu0 0.0
    %200 = vmatpush2.msra.mxu0 0.0
    %201 = vmatprep.subr.mxu0 0.0
    %202 = vmatpush2.msra.mxu0 0.0
    %203 = vmatprep.subr.mxu0 0.0
    %204 = vmatpush2.msra.mxu0 0.0
    %205 = vmatprep.subr.mxu0 0.0
    %206 = vmatpush2.msra.mxu0 0.0
    %207 = vmatprep.subr.mxu0 0.0
    %208 = vmatpush2.msra.mxu0 0.0
    %209 = vmatprep.subr.mxu0 0.0
    %210 = vmatpush2.msra.mxu0 0.0
    %211 = vmatprep.subr.mxu0 0.0
    %212 = vmatpush2.msra.mxu0 0.0
    %213 = vmatprep.subr.mxu0 0.0
    %214 = vmatpush2.msra.mxu0 0.0
    %215 = vmatprep.subr.mxu0 0.0
    %216 = vmatpush2.msra.mxu0 0.0
    %217 = vmatprep.mubr.f32.mxu0 0.0
    %218 = vmatmul.mubr.f32.gmra.mxu0 %v25
    %v219 = vpop.f32.mrf.mxu0
    %v220 = vadd.f32 0.0, %v219
    %v221 = vpop.f32.mrf.mxu0
    %v222 = vadd.f32 0.0, %v221
    %223 = vmatprep.mubr.f32.mxu0 0.0
    %224 = vmatmul.mubr.f32.gmra.mxu0 %v26
    %v225 = vpop.f32.mrf.mxu0
    %v226 = vadd.f32 0.0, %v225
    %v227 = vpop.f32.mrf.mxu0
    %v228 = vadd.f32 0.0, %v227
    %229 = vmatprep.mubr.f32.mxu0 0.0
    %230 = vmatmul.mubr.f32.gmra.mxu0 %v27
    %v231 = vpop.f32.mrf.mxu0
    %v232 = vadd.f32 0.0, %v231
    %v233 = vpop.f32.mrf.mxu0
    %v234 = vadd.f32 0.0, %v233
    %235 = vmatprep.mubr.f32.mxu0 0.0
    %236 = vmatmul.mubr.f32.gmra.mxu0 %v28
    %v237 = vpop.f32.mrf.mxu0
    %v238 = vadd.f32 0.0, %v237
    %v239 = vpop.f32.mrf.mxu0
    %v240 = vadd.f32 0.0, %v239
    %241 = vmatprep.mubr.f32.mxu0 0.0
    %242 = vmatmul.mubr.f32.gmra.mxu0 %v29
    %v243 = vpop.f32.mrf.mxu0
    %v244 = vadd.f32 0.0, %v243
    %v245 = vpop.f32.mrf.mxu0
    %v246 = vadd.f32 0.0, %v245
    %247 = vmatprep.mubr.f32.mxu0 0.0
    %248 = vmatmul.mubr.f32.gmra.mxu0 %v30
    %v249 = vpop.f32.mrf.mxu0
    %v250 = vadd.f32 0.0, %v249
    %v251 = vpop.f32.mrf.mxu0
    %v252 = vadd.f32 0.0, %v251
    %253 = vmatprep.mubr.f32.mxu0 0.0
    %254 = vmatmul.mubr.f32.gmra.mxu0 %v31
    %v255 = vpop.f32.mrf.mxu0
    %v256 = vadd.f32 0.0, %v255
    %v257 = vpop.f32.mrf.mxu0
    %v258 = vadd.f32 0.0, %v257
    %259 = vmatprep.mubr.f32.mxu0 0.0
    %260 = vmatmul.mubr.f32.gmra.mxu0 %v32
    %v261 = vpop.f32.mrf.mxu0
    %v262 = vadd.f32 0.0, %v261
    %v263 = vpop.f32.mrf.mxu0
    %v264 = vadd.f32 0.0, %v263
    %265 = vmatprep.mubr.f32.mxu0 0.0
    %266 = vmatmul.mubr.f32.gmra.mxu0 %v33
    %v267 = vpop.f32.mrf.mxu0
    %v268 = vadd.f32 0.0, %v267
    %v269 = vpop.f32.mrf.mxu0
    %v270 = vadd.f32 0.0, %v269
    %271 = vmatprep.mubr.f32.mxu0 0.0
    %272 = vmatmul.mubr.f32.gmra.mxu0 %v34
    %v273 = vpop.f32.mrf.mxu0
    %v274 = vadd.f32 0.0, %v273
    %v275 = vpop.f32.mrf.mxu0
    %v276 = vadd.f32 0.0, %v275
    %277 = vmatprep.mubr.f32.mxu0 0.0
    %278 = vmatmul.mubr.f32.gmra.mxu0 %v35
    %v279 = vpop.f32.mrf.mxu0
    %v280 = vadd.f32 0.0, %v279
    %v281 = vpop.f32.mrf.mxu0
    %v282 = vadd.f32 0.0, %v281
    %283 = vmatprep.mubr.f32.mxu0 0.0
    %284 = vmatmul.mubr.f32.gmra.mxu0 %v36
    %v285 = vpop.f32.mrf.mxu0
    %v286 = vadd.f32 0.0, %v285
    %v287 = vpop.f32.mrf.mxu0
    %v288 = vadd.f32 0.0, %v287
    %289 = vmatprep.mubr.f32.mxu0 0.0
    %290 = vmatmul.mubr.f32.gmra.mxu0 %v37
    %v291 = vpop.f32.mrf.mxu0
    %v292 = vadd.f32 0.0, %v291
    %v293 = vpop.f32.mrf.mxu0
    %v294 = vadd.f32 0.0, %v293
    %295 = vmatprep.mubr.f32.mxu0 0.0
    %296 = vmatmul.mubr.f32.gmra.mxu0 %v38
    %v297 = vpop.f32.mrf.mxu0
    %v298 = vadd.f32 0.0, %v297
    %v299 = vpop.f32.mrf.mxu0
    %v300 = vadd.f32 0.0, %v299
    %301 = vmatprep.mubr.f32.mxu0 0.0
    %302 = vmatmul.mubr.f32.gmra.mxu0 %v39
    %v303 = vpop.f32.mrf.mxu0
    %v304 = vadd.f32 0.0, %v303
    %v305 = vpop.f32.mrf.mxu0
    %v306 = vadd.f32 0.0, %v305
    %307 = vmatprep.mubr.f32.mxu0 0.0
    %308 = vmatmul.mubr.f32.gmra.mxu0 %v40
    %v309 = vpop.f32.mrf.mxu0
    %v310 = vadd.f32 0.0, %v309
    %v311 = vpop.f32.mrf.mxu0
    %v312 = vadd.f32 0.0, %v311
    %313 = vmatprep.mubr.f32.mxu0 0.0
    %314 = vmatmul.mubr.f32.gmra.mxu0 %v41
    %v315 = vpop.f32.mrf.mxu0
    %v316 = vadd.f32 0.0, %v315
    %v317 = vpop.f32.mrf.mxu0
    %v318 = vadd.f32 0.0, %v317
    %319 = vmatprep.mubr.f32.mxu0 0.0
    %320 = vmatmul.mubr.f32.gmra.mxu0 %v42
    %v321 = vpop.f32.mrf.mxu0
    %v322 = vadd.f32 0.0, %v321
    %v323 = vpop.f32.mrf.mxu0
    %v324 = vadd.f32 0.0, %v323
    %325 = vmatprep.mubr.f32.mxu0 0.0
    %326 = vmatmul.mubr.f32.gmra.mxu0 %v43
    %v327 = vpop.f32.mrf.mxu0
    %v328 = vadd.f32 0.0, %v327
    %v329 = vpop.f32.mrf.mxu0
    %v330 = vadd.f32 0.0, %v329
    %331 = vmatprep.mubr.f32.mxu0 0.0
    %332 = vmatmul.mubr.f32.gmra.mxu0 %v44
    %v333 = vpop.f32.mrf.mxu0
    %v334 = vadd.f32 0.0, %v333
    %v335 = vpop.f32.mrf.mxu0
    %v336 = vadd.f32 0.0, %v335
    %337 = vmatprep.mubr.f32.mxu0 0.0
    %338 = vmatmul.mubr.f32.gmra.mxu0 %v45
    %v339 = vpop.f32.mrf.mxu0
    %v340 = vadd.f32 0.0, %v339
    %v341 = vpop.f32.mrf.mxu0
    %v342 = vadd.f32 0.0, %v341
    %343 = vmatprep.mubr.f32.mxu0 0.0
    %344 = vmatmul.mubr.f32.gmra.mxu0 %v46
    %v345 = vpop.f32.mrf.mxu0
    %v346 = vadd.f32 0.0, %v345
    %v347 = vpop.f32.mrf.mxu0
    %v348 = vadd.f32 0.0, %v347
    %349 = vmatprep.mubr.f32.mxu0 0.0
    %350 = vmatmul.mubr.f32.gmra.mxu0 %v47
    %v351 = vpop.f32.mrf.mxu0
    %v352 = vadd.f32 0.0, %v351
    %v353 = vpop.f32.mrf.mxu0
    %v354 = vadd.f32 0.0, %v353
    %355 = vmatprep.mubr.f32.mxu0 0.0
    %356 = vmatmul.mubr.f32.gmra.mxu0 %v48
    %v357 = vpop.f32.mrf.mxu0
    %v358 = vadd.f32 0.0, %v357
    %v359 = vpop.f32.mrf.mxu0
    %v360 = vadd.f32 0.0, %v359
    %361 = vmatprep.mubr.f32.mxu0 0.0
    %362 = vmatmul.mubr.f32.gmra.mxu0 %v49
    %v363 = vpop.f32.mrf.mxu0
    %v364 = vadd.f32 0.0, %v363
    %v365 = vpop.f32.mrf.mxu0
    %v366 = vadd.f32 0.0, %v365
    %367 = vmatprep.mubr.f32.mxu0 0.0
    %368 = vmatmul.mubr.f32.gmra.mxu0 %v50
    %v369 = vpop.f32.mrf.mxu0
    %v370 = vadd.f32 0.0, %v369
    %v371 = vpop.f32.mrf.mxu0
    %v372 = vadd.f32 0.0, %v371
    %373 = vmatprep.mubr.f32.mxu0 0.0
    %374 = vmatmul.mubr.f32.gmra.mxu0 %v51
    %v375 = vpop.f32.mrf.mxu0
    %v376 = vadd.f32 0.0, %v375
    %v377 = vpop.f32.mrf.mxu0
    %v378 = vadd.f32 0.0, %v377
    %379 = vmatprep.mubr.f32.mxu0 0.0
    %380 = vmatmul.mubr.f32.gmra.mxu0 %v52
    %v381 = vpop.f32.mrf.mxu0
    %v382 = vadd.f32 0.0, %v381
    %v383 = vpop.f32.mrf.mxu0
    %v384 = vadd.f32 0.0, %v383
    %385 = vmatprep.mubr.f32.mxu0 0.0
    %386 = vmatmul.mubr.f32.gmra.mxu0 %v53
    %v387 = vpop.f32.mrf.mxu0
    %v388 = vadd.f32 0.0, %v387
    %v389 = vpop.f32.mrf.mxu0
    %v390 = vadd.f32 0.0, %v389
    %391 = vmatprep.mubr.f32.mxu0 0.0
    %392 = vmatmul.mubr.f32.gmra.mxu0 %v54
    %v393 = vpop.f32.mrf.mxu0
    %v394 = vadd.f32 0.0, %v393
    %v395 = vpop.f32.mrf.mxu0
    %v396 = vadd.f32 0.0, %v395
    %397 = vmatprep.mubr.f32.mxu0 0.0
    %398 = vmatmul.mubr.f32.gmra.mxu0 %v55
    %v399 = vpop.f32.mrf.mxu0
    %v400 = vadd.f32 0.0, %v399
    %v401 = vpop.f32.mrf.mxu0
    %v402 = vadd.f32 0.0, %v401
    %403 = vmatprep.mubr.f32.mxu0 0.0
    %404 = vmatmul.mubr.f32.gmra.mxu0 %v56
    %v405 = vpop.f32.mrf.mxu0
    %v406 = vadd.f32 0.0, %v405
    %v407 = vpop.f32.mrf.mxu0
    %v408 = vadd.f32 0.0, %v407
    %409 = vmatprep.mubr.f32.mxu0 0.0
    %410 = vmatmul.mubr.f32.gmra.mxu0 %v57
    %v411 = vpop.f32.mrf.mxu0
    %v412 = vadd.f32 0.0, %v411
    %v413 = vpop.f32.mrf.mxu0
    %v414 = vadd.f32 0.0, %v413
    %415 = vmatprep.mubr.f32.mxu0 0.0
    %416 = vmatmul.mubr.f32.gmra.mxu0 %v58
    %v417 = vpop.f32.mrf.mxu0
    %v418 = vadd.f32 0.0, %v417
    %v419 = vpop.f32.mrf.mxu0
    %v420 = vadd.f32 0.0, %v419
    %421 = vmatprep.mubr.f32.mxu0 0.0
    %422 = vmatmul.mubr.f32.gmra.mxu0 %v59
    %v423 = vpop.f32.mrf.mxu0
    %v424 = vadd.f32 0.0, %v423
    %v425 = vpop.f32.mrf.mxu0
    %v426 = vadd.f32 0.0, %v425
    %427 = vmatprep.mubr.f32.mxu0 0.0
    %428 = vmatmul.mubr.f32.gmra.mxu0 %v60
    %v429 = vpop.f32.mrf.mxu0
    %v430 = vadd.f32 0.0, %v429
    %v431 = vpop.f32.mrf.mxu0
    %v432 = vadd.f32 0.0, %v431
    %433 = vmatprep.mubr.f32.mxu0 0.0
    %434 = vmatmul.mubr.f32.gmra.mxu0 %v61
    %v435 = vpop.f32.mrf.mxu0
    %v436 = vadd.f32 0.0, %v435
    %v437 = vpop.f32.mrf.mxu0
    %v438 = vadd.f32 0.0, %v437
    %439 = vmatprep.mubr.f32.mxu0 0.0
    %440 = vmatmul.mubr.f32.gmra.mxu0 %v62
    %v441 = vpop.f32.mrf.mxu0
    %v442 = vadd.f32 0.0, %v441
    %v443 = vpop.f32.mrf.mxu0
    %v444 = vadd.f32 0.0, %v443
    %445 = vmatprep.mubr.f32.mxu0 0.0
    %446 = vmatmul.mubr.f32.gmra.mxu0 %v63
    %v447 = vpop.f32.mrf.mxu0
    %v448 = vadd.f32 0.0, %v447
    %v449 = vpop.f32.mrf.mxu0
    %v450 = vadd.f32 0.0, %v449
    %451 = vmatprep.mubr.f32.mxu0 0.0
    %452 = vmatmul.mubr.f32.gmra.mxu0 %v64
    %v453 = vpop.f32.mrf.mxu0
    %v454 = vadd.f32 0.0, %v453
    %v455 = vpop.f32.mrf.mxu0
    %v456 = vadd.f32 0.0, %v455
    %457 = vmatprep.mubr.f32.mxu0 0.0
    %458 = vmatmul.mubr.f32.gmra.mxu0 %v65
    %v459 = vpop.f32.mrf.mxu0
    %v460 = vadd.f32 0.0, %v459
    %v461 = vpop.f32.mrf.mxu0
    %v462 = vadd.f32 0.0, %v461
    %463 = vmatprep.mubr.f32.mxu0 0.0
    %464 = vmatmul.mubr.f32.gmra.mxu0 %v66
    %v465 = vpop.f32.mrf.mxu0
    %v466 = vadd.f32 0.0, %v465
    %v467 = vpop.f32.mrf.mxu0
    %v468 = vadd.f32 0.0, %v467
    %469 = vmatprep.mubr.f32.mxu0 0.0
    %470 = vmatmul.mubr.f32.gmra.mxu0 %v67
    %v471 = vpop.f32.mrf.mxu0
    %v472 = vadd.f32 0.0, %v471
    %v473 = vpop.f32.mrf.mxu0
    %v474 = vadd.f32 0.0, %v473
    %475 = vmatprep.mubr.f32.mxu0 0.0
    %476 = vmatmul.mubr.f32.gmra.mxu0 %v68
    %v477 = vpop.f32.mrf.mxu0
    %v478 = vadd.f32 0.0, %v477
    %v479 = vpop.f32.mrf.mxu0
    %v480 = vadd.f32 0.0, %v479
    %481 = vmatprep.mubr.f32.mxu0 0.0
    %482 = vmatmul.mubr.f32.gmra.mxu0 %v69
    %v483 = vpop.f32.mrf.mxu0
    %v484 = vadd.f32 0.0, %v483
    %v485 = vpop.f32.mrf.mxu0
    %v486 = vadd.f32 0.0, %v485
    %487 = vmatprep.mubr.f32.mxu0 0.0
    %488 = vmatmul.mubr.f32.gmra.mxu0 %v70
    %v489 = vpop.f32.mrf.mxu0
    %v490 = vadd.f32 0.0, %v489
    %v491 = vpop.f32.mrf.mxu0
    %v492 = vadd.f32 0.0, %v491
    %493 = vmatprep.mubr.f32.mxu0 0.0
    %494 = vmatmul.mubr.f32.gmra.mxu0 %v71
    %v495 = vpop.f32.mrf.mxu0
    %v496 = vadd.f32 0.0, %v495
    %v497 = vpop.f32.mrf.mxu0
    %v498 = vadd.f32 0.0, %v497
    %499 = vmatprep.mubr.f32.mxu0 0.0
    %500 = vmatmul.mubr.f32.gmra.mxu0 %v72
    %v501 = vpop.f32.mrf.mxu0
    %v502 = vadd.f32 0.0, %v501
    %v503 = vpop.f32.mrf.mxu0
    %v504 = vadd.f32 0.0, %v503
    %505 = vmatprep.mubr.f32.mxu0 0.0
    %506 = vmatmul.mubr.f32.gmra.mxu0 %v73
    %v507 = vpop.f32.mrf.mxu0
    %v508 = vadd.f32 0.0, %v507
    %v509 = vpop.f32.mrf.mxu0
    %v510 = vadd.f32 0.0, %v509
    %511 = vmatprep.mubr.f32.mxu0 0.0
    %512 = vmatmul.mubr.f32.gmra.mxu0 %v74
    %v513 = vpop.f32.mrf.mxu0
    %v514 = vadd.f32 0.0, %v513
    %v515 = vpop.f32.mrf.mxu0
    %v516 = vadd.f32 0.0, %v515
    %517 = vmatprep.mubr.f32.mxu0 0.0
    %518 = vmatmul.mubr.f32.gmra.mxu0 %v75
    %v519 = vpop.f32.mrf.mxu0
    %v520 = vadd.f32 0.0, %v519
    %v521 = vpop.f32.mrf.mxu0
    %v522 = vadd.f32 0.0, %v521
    %523 = vmatprep.mubr.f32.mxu0 0.0
    %524 = vmatmul.mubr.f32.gmra.mxu0 %v76
    %v525 = vpop.f32.mrf.mxu0
    %v526 = vadd.f32 0.0, %v525
    %v527 = vpop.f32.mrf.mxu0
    %v528 = vadd.f32 0.0, %v527
    %529 = vmatprep.mubr.f32.mxu0 0.0
    %530 = vmatmul.mubr.f32.gmra.mxu0 %v77
    %v531 = vpop.f32.mrf.mxu0
    %v532 = vadd.f32 0.0, %v531
    %v533 = vpop.f32.mrf.mxu0
    %v534 = vadd.f32 0.0, %v533
    %535 = vmatprep.mubr.f32.mxu0 0.0
    %536 = vmatmul.mubr.f32.gmra.mxu0 %v78
    %v537 = vpop.f32.mrf.mxu0
    %v538 = vadd.f32 0.0, %v537
    %v539 = vpop.f32.mrf.mxu0
    %v540 = vadd.f32 0.0, %v539
    %541 = vmatprep.mubr.f32.mxu0 0.0
    %542 = vmatmul.mubr.f32.gmra.mxu0 %v79
    %v543 = vpop.f32.mrf.mxu0
    %v544 = vadd.f32 0.0, %v543
    %v545 = vpop.f32.mrf.mxu0
    %v546 = vadd.f32 0.0, %v545
    %547 = vmatprep.mubr.f32.mxu0 0.0
    %548 = vmatmul.mubr.f32.gmra.mxu0 %v80
    %v549 = vpop.f32.mrf.mxu0
    %v550 = vadd.f32 0.0, %v549
    %v551 = vpop.f32.mrf.mxu0
    %v552 = vadd.f32 0.0, %v551
    %553 = vmatprep.mubr.f32.mxu0 0.0
    %554 = vmatmul.mubr.f32.gmra.mxu0 %v81
    %v555 = vpop.f32.mrf.mxu0
    %v556 = vadd.f32 0.0, %v555
    %v557 = vpop.f32.mrf.mxu0
    %v558 = vadd.f32 0.0, %v557
    %559 = vmatprep.mubr.f32.mxu0 0.0
    %560 = vmatmul.mubr.f32.gmra.mxu0 %v82
    %v561 = vpop.f32.mrf.mxu0
    %v562 = vadd.f32 0.0, %v561
    %v563 = vpop.f32.mrf.mxu0
    %v564 = vadd.f32 0.0, %v563
    %565 = vmatprep.mubr.f32.mxu0 0.0
    %566 = vmatmul.mubr.f32.gmra.mxu0 %v83
    %v567 = vpop.f32.mrf.mxu0
    %v568 = vadd.f32 0.0, %v567
    %v569 = vpop.f32.mrf.mxu0
    %v570 = vadd.f32 0.0, %v569
    %571 = vmatprep.mubr.f32.mxu0 0.0
    %572 = vmatmul.mubr.f32.gmra.mxu0 %v84
    %v573 = vpop.f32.mrf.mxu0
    %v574 = vadd.f32 0.0, %v573
    %v575 = vpop.f32.mrf.mxu0
    %v576 = vadd.f32 0.0, %v575
    %577 = vmatprep.mubr.f32.mxu0 0.0
    %578 = vmatmul.mubr.f32.gmra.mxu0 %v85
    %v579 = vpop.f32.mrf.mxu0
    %v580 = vadd.f32 0.0, %v579
    %v581 = vpop.f32.mrf.mxu0
    %v582 = vadd.f32 0.0, %v581
    %583 = vmatprep.mubr.f32.mxu0 0.0
    %584 = vmatmul.mubr.f32.gmra.mxu0 %v86
    %v585 = vpop.f32.mrf.mxu0
    %v586 = vadd.f32 0.0, %v585
    %v587 = vpop.f32.mrf.mxu0
    %v588 = vadd.f32 0.0, %v587
    %589 = vmatprep.mubr.f32.mxu0 0.0
    %590 = vmatmul.mubr.f32.gmra.mxu0 %v87
    %v591 = vpop.f32.mrf.mxu0
    %v592 = vadd.f32 0.0, %v591
    %v593 = vpop.f32.mrf.mxu0
    %v594 = vadd.f32 0.0, %v593
    %595 = vmatprep.mubr.f32.mxu0 0.0
    %596 = vmatmul.mubr.f32.gmra.mxu0 %v88
    %v597 = vpop.f32.mrf.mxu0
    %v598 = vadd.f32 0.0, %v597
    %v599 = vpop.f32.mrf.mxu0
    %v600 = vadd.f32 0.0, %v599
    %601 = vmatprep.mubr.f32.mxu0 0.0
    %602 = vmatmul.mubr.f32.gmra.mxu0 %v89
    %v603 = vpop.f32.mrf.mxu0
    %v604 = vadd.f32 0.0, %v603
    %v605 = vpop.f32.mrf.mxu0
    %v606 = vadd.f32 0.0, %v605
    %607 = vmatprep.mubr.f32.mxu0 0.0
    %608 = vmatmul.mubr.f32.gmra.mxu0 %v90
    %v609 = vpop.f32.mrf.mxu0
    %v610 = vadd.f32 0.0, %v609
    %v611 = vpop.f32.mrf.mxu0
    %v612 = vadd.f32 0.0, %v611
    %613 = vmatprep.mubr.f32.mxu0 0.0
    %614 = vmatmul.mubr.f32.gmra.mxu0 %v91
    %v615 = vpop.f32.mrf.mxu0
    %v616 = vadd.f32 0.0, %v615
    %v617 = vpop.f32.mrf.mxu0
    %v618 = vadd.f32 0.0, %v617
    %619 = vmatprep.mubr.f32.mxu0 0.0
    %620 = vmatmul.mubr.f32.gmra.mxu0 %v92
    %v621 = vpop.f32.mrf.mxu0
    %v622 = vadd.f32 0.0, %v621
    %v623 = vpop.f32.mrf.mxu0
    %v624 = vadd.f32 0.0, %v623
    %625 = vmatprep.mubr.f32.mxu0 0.0
    %626 = vmatmul.mubr.f32.gmra.mxu0 %v93
    %v627 = vpop.f32.mrf.mxu0
    %v628 = vadd.f32 0.0, %v627
    %v629 = vpop.f32.mrf.mxu0
    %v630 = vadd.f32 0.0, %v629
    %631 = vmatprep.mubr.f32.mxu0 0.0
    %632 = vmatmul.mubr.f32.gmra.mxu0 %v94
    %v633 = vpop.f32.mrf.mxu0
    %v634 = vadd.f32 0.0, %v633
    %v635 = vpop.f32.mrf.mxu0
    %v636 = vadd.f32 0.0, %v635
    %637 = vmatprep.mubr.f32.mxu0 0.0
    %638 = vmatmul.mubr.f32.gmra.mxu0 %v95
    %v639 = vpop.f32.mrf.mxu0
    %v640 = vadd.f32 0.0, %v639
    %v641 = vpop.f32.mrf.mxu0
    %v642 = vadd.f32 0.0, %v641
    %643 = vmatprep.mubr.f32.mxu0 0.0
    %644 = vmatmul.mubr.f32.gmra.mxu0 %v96
    %v645 = vpop.f32.mrf.mxu0
    %v646 = vadd.f32 0.0, %v645
    %v647 = vpop.f32.mrf.mxu0
    %v648 = vadd.f32 0.0, %v647
    %649 = vmatprep.mubr.f32.mxu0 0.0
    %650 = vmatmul.mubr.f32.gmra.mxu0 %v97
    %v651 = vpop.f32.mrf.mxu0
    %v652 = vadd.f32 0.0, %v651
    %v653 = vpop.f32.mrf.mxu0
    %v654 = vadd.f32 0.0, %v653
    %655 = vmatprep.mubr.f32.mxu0 0.0
    %656 = vmatmul.mubr.f32.gmra.mxu0 %v98
    %v657 = vpop.f32.mrf.mxu0
    %v658 = vadd.f32 0.0, %v657
    %v659 = vpop.f32.mrf.mxu0
    %v660 = vadd.f32 0.0, %v659
    %661 = vmatprep.mubr.f32.mxu0 0.0
    %662 = vmatmul.mubr.f32.gmra.mxu0 %v99
    %v663 = vpop.f32.mrf.mxu0
    %v664 = vadd.f32 0.0, %v663
    %v665 = vpop.f32.mrf.mxu0
    %v666 = vadd.f32 0.0, %v665
    %667 = vmatprep.mubr.f32.mxu0 0.0
    %668 = vmatmul.mubr.f32.gmra.mxu0 %v100
    %v669 = vpop.f32.mrf.mxu0
    %v670 = vadd.f32 0.0, %v669
    %v671 = vpop.f32.mrf.mxu0
    %v672 = vadd.f32 0.0, %v671
    %673 = vmatprep.mubr.f32.mxu0 0.0
    %674 = vmatmul.mubr.f32.gmra.mxu0 %v101
    %v675 = vpop.f32.mrf.mxu0
    %v676 = vadd.f32 0.0, %v675
    %v677 = vpop.f32.mrf.mxu0
    %v678 = vadd.f32 0.0, %v677
    %679 = vmatprep.mubr.f32.mxu0 0.0
    %680 = vmatmul.mubr.f32.gmra.mxu0 %v102
    %v681 = vpop.f32.mrf.mxu0
    %v682 = vadd.f32 0.0, %v681
    %v683 = vpop.f32.mrf.mxu0
    %v684 = vadd.f32 0.0, %v683
    %685 = vmatprep.mubr.f32.mxu0 0.0
    %686 = vmatmul.mubr.f32.gmra.mxu0 %v103
    %v687 = vpop.f32.mrf.mxu0
    %v688 = vadd.f32 0.0, %v687
    %v689 = vpop.f32.mrf.mxu0
    %v690 = vadd.f32 0.0, %v689
    %691 = vmatprep.mubr.f32.mxu0 0.0
    %692 = vmatmul.mubr.f32.gmra.mxu0 %v104
    %v693 = vpop.f32.mrf.mxu0
    %v694 = vadd.f32 0.0, %v693
    %v695 = vpop.f32.mrf.mxu0
    %v696 = vadd.f32 0.0, %v695
    %697 = vmatprep.mubr.f32.mxu0 0.0
    %698 = vmatmul.mubr.f32.gmra.mxu0 %v105
    %v699 = vpop.f32.mrf.mxu0
    %v700 = vadd.f32 0.0, %v699
    %v701 = vpop.f32.mrf.mxu0
    %v702 = vadd.f32 0.0, %v701
    %703 = vmatprep.mubr.f32.mxu0 0.0
    %704 = vmatmul.mubr.f32.gmra.mxu0 %v106
    %v705 = vpop.f32.mrf.mxu0
    %v706 = vadd.f32 0.0, %v705
    %v707 = vpop.f32.mrf.mxu0
    %v708 = vadd.f32 0.0, %v707
    %709 = vmatprep.mubr.f32.mxu0 0.0
    %710 = vmatmul.mubr.f32.gmra.mxu0 %v107
    %v711 = vpop.f32.mrf.mxu0
    %v712 = vadd.f32 0.0, %v711
    %v713 = vpop.f32.mrf.mxu0
    %v714 = vadd.f32 0.0, %v713
    %715 = vmatprep.mubr.f32.mxu0 0.0
    %716 = vmatmul.mubr.f32.gmra.mxu0 %v108
    %v717 = vpop.f32.mrf.mxu0
    %v718 = vadd.f32 0.0, %v717
    %v719 = vpop.f32.mrf.mxu0
    %v720 = vadd.f32 0.0, %v719
    %721 = vmatprep.mubr.f32.mxu0 0.0
    %722 = vmatmul.mubr.f32.gmra.mxu0 %v109
    %v723 = vpop.f32.mrf.mxu0
    %v724 = vadd.f32 0.0, %v723
    %v725 = vpop.f32.mrf.mxu0
    %v726 = vadd.f32 0.0, %v725
    %727 = vmatprep.mubr.f32.mxu0 0.0
    %728 = vmatmul.mubr.f32.gmra.mxu0 %v110
    %v729 = vpop.f32.mrf.mxu0
    %v730 = vadd.f32 0.0, %v729
    %v731 = vpop.f32.mrf.mxu0
    %v732 = vadd.f32 0.0, %v731
    %733 = vmatprep.mubr.f32.mxu0 0.0
    %734 = vmatmul.mubr.f32.gmra.mxu0 %v111
    %v735 = vpop.f32.mrf.mxu0
    %v736 = vadd.f32 0.0, %v735
    %v737 = vpop.f32.mrf.mxu0
    %v738 = vadd.f32 0.0, %v737
    %739 = vmatprep.mubr.f32.mxu0 0.0
    %740 = vmatmul.mubr.f32.gmra.mxu0 %v112
    %v741 = vpop.f32.mrf.mxu0
    %v742 = vadd.f32 0.0, %v741
    %v743 = vpop.f32.mrf.mxu0
    %v744 = vadd.f32 0.0, %v743
    %745 = vmatprep.mubr.f32.mxu0 0.0
    %746 = vmatmul.mubr.f32.gmra.mxu0 %v113
    %v747 = vpop.f32.mrf.mxu0
    %v748 = vadd.f32 0.0, %v747
    %v749 = vpop.f32.mrf.mxu0
    %v750 = vadd.f32 0.0, %v749
    %751 = vmatprep.mubr.f32.mxu0 0.0
    %752 = vmatmul.mubr.f32.gmra.mxu0 %v114
    %v753 = vpop.f32.mrf.mxu0
    %v754 = vadd.f32 0.0, %v753
    %v755 = vpop.f32.mrf.mxu0
    %v756 = vadd.f32 0.0, %v755
    %757 = vmatprep.mubr.f32.mxu0 0.0
    %758 = vmatmul.mubr.f32.gmra.mxu0 %v115
    %v759 = vpop.f32.mrf.mxu0
    %v760 = vadd.f32 0.0, %v759
    %v761 = vpop.f32.mrf.mxu0
    %v762 = vadd.f32 0.0, %v761
    %763 = vmatprep.mubr.f32.mxu0 0.0
    %764 = vmatmul.mubr.f32.gmra.mxu0 %v116
    %v765 = vpop.f32.mrf.mxu0
    %v766 = vadd.f32 0.0, %v765
    %v767 = vpop.f32.mrf.mxu0
    %v768 = vadd.f32 0.0, %v767
    %769 = vmatprep.mubr.f32.mxu0 0.0
    %770 = vmatmul.mubr.f32.gmra.mxu0 %v117
    %v771 = vpop.f32.mrf.mxu0
    %v772 = vadd.f32 0.0, %v771
    %v773 = vpop.f32.mrf.mxu0
    %v774 = vadd.f32 0.0, %v773
    %775 = vmatprep.mubr.f32.mxu0 0.0
    %776 = vmatmul.mubr.f32.gmra.mxu0 %v118
    %v777 = vpop.f32.mrf.mxu0
    %v778 = vadd.f32 0.0, %v777
    %v779 = vpop.f32.mrf.mxu0
    %v780 = vadd.f32 0.0, %v779
    %781 = vmatprep.mubr.f32.mxu0 0.0
    %782 = vmatmul.mubr.f32.gmra.mxu0 %v119
    %v783 = vpop.f32.mrf.mxu0
    %v784 = vadd.f32 0.0, %v783
    %v785 = vpop.f32.mrf.mxu0
    %v786 = vadd.f32 0.0, %v785
    %787 = vmatprep.mubr.f32.mxu0 0.0
    %788 = vmatmul.mubr.f32.gmra.mxu0 %v120
    %v789 = vpop.f32.mrf.mxu0
    %v790 = vadd.f32 0.0, %v789
    %v791 = vpop.f32.mrf.mxu0
    %v792 = vadd.f32 0.0, %v791
    %793 = vdwg.mxu0
    %794 = vst [vmem:[%s2] sm:$0xff] %v220
    %vm795 = vcmask 556032
    %796 = vst.msk [vmem:[%s2 + $0x8] sm:$0xff] %vm795, %v222
    %797 = vst [vmem:[%s2 + $0x10] sm:$0xff] %v226
    %798 = vst.msk [vmem:[%s2 + $0x18] sm:$0xff] %vm795, %v228
    %799 = vst [vmem:[%s2 + $0x20] sm:$0xff] %v232
    %800 = vst.msk [vmem:[%s2 + $0x28] sm:$0xff] %vm795, %v234
    %801 = vst [vmem:[%s2 + $0x30] sm:$0xff] %v238
    %802 = vst.msk [vmem:[%s2 + $0x38] sm:$0xff] %vm795, %v240
    %803 = vst [vmem:[%s2 + $0x40] sm:$0xff] %v244
    %804 = vst.msk [vmem:[%s2 + $0x48] sm:$0xff] %vm795, %v246
    %805 = vst [vmem:[%s2 + $0x50] sm:$0xff] %v250
    %806 = vst.msk [vmem:[%s2 + $0x58] sm:$0xff] %vm795, %v252
    %807 = vst [vmem:[%s2 + $0x60] sm:$0xff] %v256
    %808 = vst.msk [vmem:[%s2 + $0x68] sm:$0xff] %vm795, %v258
    %809 = vst [vmem:[%s2 + $0x70] sm:$0xff] %v262
    %810 = vst.msk [vmem:[%s2 + $0x78] sm:$0xff] %vm795, %v264
    %811 = vst [vmem:[%s2 + $0x80] sm:$0xff] %v268
    %812 = vst.msk [vmem:[%s2 + $0x88] sm:$0xff] %vm795, %v270
    %813 = vst [vmem:[%s2 + $0x90] sm:$0xff] %v274
    %814 = vst.msk [vmem:[%s2 + $0x98] sm:$0xff] %vm795, %v276
    %815 = vst [vmem:[%s2 + $0xa0] sm:$0xff] %v280
    %816 = vst.msk [vmem:[%s2 + $0xa8] sm:$0xff] %vm795, %v282
    %817 = vst [vmem:[%s2 + $0xb0] sm:$0xff] %v286
    %818 = vst.msk [vmem:[%s2 + $0xb8] sm:$0xff] %vm795, %v288
    %819 = vst [vmem:[%s2 + $0xc0] sm:$0xff] %v292
    %820 = vst.msk [vmem:[%s2 + $0xc8] sm:$0xff] %vm795, %v294
    %821 = vst [vmem:[%s2 + $0xd0] sm:$0xff] %v298
    %822 = vst.msk [vmem:[%s2 + $0xd8] sm:$0xff] %vm795, %v300
    %823 = vst [vmem:[%s2 + $0xe0] sm:$0xff] %v304
    %824 = vst.msk [vmem:[%s2 + $0xe8] sm:$0xff] %vm795, %v306
    %825 = vst [vmem:[%s2 + $0xf0] sm:$0xff] %v310
    %826 = vst.msk [vmem:[%s2 + $0xf8] sm:$0xff] %vm795, %v312
    %827 = vst [vmem:[%s2 + $0x100] sm:$0xff] %v316
    %828 = vst.msk [vmem:[%s2 + $0x108] sm:$0xff] %vm795, %v318
    %829 = vst [vmem:[%s2 + $0x110] sm:$0xff] %v322
    %830 = vst.msk [vmem:[%s2 + $0x118] sm:$0xff] %vm795, %v324
    %831 = vst [vmem:[%s2 + $0x120] sm:$0xff] %v328
    %832 = vst.msk [vmem:[%s2 + $0x128] sm:$0xff] %vm795, %v330
    %833 = vst [vmem:[%s2 + $0x130] sm:$0xff] %v334
    %834 = vst.msk [vmem:[%s2 + $0x138] sm:$0xff] %vm795, %v336
    %835 = vst [vmem:[%s2 + $0x140] sm:$0xff] %v340
    %836 = vst.msk [vmem:[%s2 + $0x148] sm:$0xff] %vm795, %v342
    %837 = vst [vmem:[%s2 + $0x150] sm:$0xff] %v346
    %838 = vst.msk [vmem:[%s2 + $0x158] sm:$0xff] %vm795, %v348
    %839 = vst [vmem:[%s2 + $0x160] sm:$0xff] %v352
    %840 = vst.msk [vmem:[%s2 + $0x168] sm:$0xff] %vm795, %v354
    %841 = vst [vmem:[%s2 + $0x170] sm:$0xff] %v358
    %842 = vst.msk [vmem:[%s2 + $0x178] sm:$0xff] %vm795, %v360
    %843 = vst [vmem:[%s2 + $0x180] sm:$0xff] %v364
    %844 = vst.msk [vmem:[%s2 + $0x188] sm:$0xff] %vm795, %v366
    %845 = vst [vmem:[%s2 + $0x190] sm:$0xff] %v370
    %846 = vst.msk [vmem:[%s2 + $0x198] sm:$0xff] %vm795, %v372
    %847 = vst [vmem:[%s2 + $0x1a0] sm:$0xff] %v376
    %848 = vst.msk [vmem:[%s2 + $0x1a8] sm:$0xff] %vm795, %v378
    %849 = vst [vmem:[%s2 + $0x1b0] sm:$0xff] %v382
    %850 = vst.msk [vmem:[%s2 + $0x1b8] sm:$0xff] %vm795, %v384
    %851 = vst [vmem:[%s2 + $0x1c0] sm:$0xff] %v388
    %852 = vst.msk [vmem:[%s2 + $0x1c8] sm:$0xff] %vm795, %v390
    %853 = vst [vmem:[%s2 + $0x1d0] sm:$0xff] %v394
    %854 = vst.msk [vmem:[%s2 + $0x1d8] sm:$0xff] %vm795, %v396
    %855 = vst [vmem:[%s2 + $0x1e0] sm:$0xff] %v400
    %856 = vst.msk [vmem:[%s2 + $0x1e8] sm:$0xff] %vm795, %v402
    %857 = vst [vmem:[%s2 + $0x1f0] sm:$0xff] %v406
    %858 = vst.msk [vmem:[%s2 + $0x1f8] sm:$0xff] %vm795, %v408
    %859 = vst [vmem:[%s2 + $0x200] sm:$0xff] %v412
    %860 = vst.msk [vmem:[%s2 + $0x208] sm:$0xff] %vm795, %v414
    %861 = vst [vmem:[%s2 + $0x210] sm:$0xff] %v418
    %862 = vst.msk [vmem:[%s2 + $0x218] sm:$0xff] %vm795, %v420
    %863 = vst [vmem:[%s2 + $0x220] sm:$0xff] %v424
    %864 = vst.msk [vmem:[%s2 + $0x228] sm:$0xff] %vm795, %v426
    %865 = vst [vmem:[%s2 + $0x230] sm:$0xff] %v430
    %866 = vst.msk [vmem:[%s2 + $0x238] sm:$0xff] %vm795, %v432
    %867 = vst [vmem:[%s2 + $0x240] sm:$0xff] %v436
    %868 = vst.msk [vmem:[%s2 + $0x248] sm:$0xff] %vm795, %v438
    %869 = vst [vmem:[%s2 + $0x250] sm:$0xff] %v442
    %870 = vst.msk [vmem:[%s2 + $0x258] sm:$0xff] %vm795, %v444
    %871 = vst [vmem:[%s2 + $0x260] sm:$0xff] %v448
    %872 = vst.msk [vmem:[%s2 + $0x268] sm:$0xff] %vm795, %v450
    %873 = vst [vmem:[%s2 + $0x270] sm:$0xff] %v454
    %874 = vst.msk [vmem:[%s2 + $0x278] sm:$0xff] %vm795, %v456
    %875 = vst [vmem:[%s2 + $0x280] sm:$0xff] %v460
    %876 = vst.msk [vmem:[%s2 + $0x288] sm:$0xff] %vm795, %v462
    %877 = vst [vmem:[%s2 + $0x290] sm:$0xff] %v466
    %878 = vst.msk [vmem:[%s2 + $0x298] sm:$0xff] %vm795, %v468
    %879 = vst [vmem:[%s2 + $0x2a0] sm:$0xff] %v472
    %880 = vst.msk [vmem:[%s2 + $0x2a8] sm:$0xff] %vm795, %v474
    %881 = vst [vmem:[%s2 + $0x2b0] sm:$0xff] %v478
    %882 = vst.msk [vmem:[%s2 + $0x2b8] sm:$0xff] %vm795, %v480
    %883 = vst [vmem:[%s2 + $0x2c0] sm:$0xff] %v484
    %884 = vst.msk [vmem:[%s2 + $0x2c8] sm:$0xff] %vm795, %v486
    %885 = vst [vmem:[%s2 + $0x2d0] sm:$0xff] %v490
    %886 = vst.msk [vmem:[%s2 + $0x2d8] sm:$0xff] %vm795, %v492
    %887 = vst [vmem:[%s2 + $0x2e0] sm:$0xff] %v496
    %888 = vst.msk [vmem:[%s2 + $0x2e8] sm:$0xff] %vm795, %v498
    %889 = vst [vmem:[%s2 + $0x2f0] sm:$0xff] %v502
    %890 = vst.msk [vmem:[%s2 + $0x2f8] sm:$0xff] %vm795, %v504
    %891 = vst [vmem:[%s2 + $0x300] sm:$0xff] %v508
    %892 = vst.msk [vmem:[%s2 + $0x308] sm:$0xff] %vm795, %v510
    %893 = vst [vmem:[%s2 + $0x310] sm:$0xff] %v514
    %894 = vst.msk [vmem:[%s2 + $0x318] sm:$0xff] %vm795, %v516
    %895 = vst [vmem:[%s2 + $0x320] sm:$0xff] %v520
    %896 = vst.msk [vmem:[%s2 + $0x328] sm:$0xff] %vm795, %v522
    %897 = vst [vmem:[%s2 + $0x330] sm:$0xff] %v526
    %898 = vst.msk [vmem:[%s2 + $0x338] sm:$0xff] %vm795, %v528
    %899 = vst [vmem:[%s2 + $0x340] sm:$0xff] %v532
    %900 = vst.msk [vmem:[%s2 + $0x348] sm:$0xff] %vm795, %v534
    %901 = vst [vmem:[%s2 + $0x350] sm:$0xff] %v538
    %902 = vst.msk [vmem:[%s2 + $0x358] sm:$0xff] %vm795, %v540
    %903 = vst [vmem:[%s2 + $0x360] sm:$0xff] %v544
    %904 = vst.msk [vmem:[%s2 + $0x368] sm:$0xff] %vm795, %v546
    %905 = vst [vmem:[%s2 + $0x370] sm:$0xff] %v550
    %906 = vst.msk [vmem:[%s2 + $0x378] sm:$0xff] %vm795, %v552
    %907 = vst [vmem:[%s2 + $0x380] sm:$0xff] %v556
    %908 = vst.msk [vmem:[%s2 + $0x388] sm:$0xff] %vm795, %v558
    %909 = vst [vmem:[%s2 + $0x390] sm:$0xff] %v562
    %910 = vst.msk [vmem:[%s2 + $0x398] sm:$0xff] %vm795, %v564
    %911 = vst [vmem:[%s2 + $0x3a0] sm:$0xff] %v568
    %912 = vst.msk [vmem:[%s2 + $0x3a8] sm:$0xff] %vm795, %v570
    %913 = vst [vmem:[%s2 + $0x3b0] sm:$0xff] %v574
    %914 = vst.msk [vmem:[%s2 + $0x3b8] sm:$0xff] %vm795, %v576
    %915 = vst [vmem:[%s2 + $0x3c0] sm:$0xff] %v580
    %916 = vst.msk [vmem:[%s2 + $0x3c8] sm:$0xff] %vm795, %v582
    %917 = vst [vmem:[%s2 + $0x3d0] sm:$0xff] %v586
    %918 = vst.msk [vmem:[%s2 + $0x3d8] sm:$0xff] %vm795, %v588
    %919 = vst [vmem:[%s2 + $0x3e0] sm:$0xff] %v592
    %920 = vst.msk [vmem:[%s2 + $0x3e8] sm:$0xff] %vm795, %v594
    %921 = vst [vmem:[%s2 + $0x3f0] sm:$0xff] %v598
    %922 = vst.msk [vmem:[%s2 + $0x3f8] sm:$0xff] %vm795, %v600
    %923 = vst [vmem:[%s2 + $0x400] sm:$0xff] %v604
    %924 = vst.msk [vmem:[%s2 + $0x408] sm:$0xff] %vm795, %v606
    %925 = vst [vmem:[%s2 + $0x410] sm:$0xff] %v610
    %926 = vst.msk [vmem:[%s2 + $0x418] sm:$0xff] %vm795, %v612
    %927 = vst [vmem:[%s2 + $0x420] sm:$0xff] %v616
    %928 = vst.msk [vmem:[%s2 + $0x428] sm:$0xff] %vm795, %v618
    %929 = vst [vmem:[%s2 + $0x430] sm:$0xff] %v622
    %930 = vst.msk [vmem:[%s2 + $0x438] sm:$0xff] %vm795, %v624
    %931 = vst [vmem:[%s2 + $0x440] sm:$0xff] %v628
    %932 = vst.msk [vmem:[%s2 + $0x448] sm:$0xff] %vm795, %v630
    %933 = vst [vmem:[%s2 + $0x450] sm:$0xff] %v634
    %934 = vst.msk [vmem:[%s2 + $0x458] sm:$0xff] %vm795, %v636
    %935 = vst [vmem:[%s2 + $0x460] sm:$0xff] %v640
    %936 = vst.msk [vmem:[%s2 + $0x468] sm:$0xff] %vm795, %v642
    %937 = vst [vmem:[%s2 + $0x470] sm:$0xff] %v646
    %938 = vst.msk [vmem:[%s2 + $0x478] sm:$0xff] %vm795, %v648
    %939 = vst [vmem:[%s2 + $0x480] sm:$0xff] %v652
    %940 = vst.msk [vmem:[%s2 + $0x488] sm:$0xff] %vm795, %v654
    %941 = vst [vmem:[%s2 + $0x490] sm:$0xff] %v658
    %942 = vst.msk [vmem:[%s2 + $0x498] sm:$0xff] %vm795, %v660
    %943 = vst [vmem:[%s2 + $0x4a0] sm:$0xff] %v664
    %944 = vst.msk [vmem:[%s2 + $0x4a8] sm:$0xff] %vm795, %v666
    %945 = vst [vmem:[%s2 + $0x4b0] sm:$0xff] %v670
    %946 = vst.msk [vmem:[%s2 + $0x4b8] sm:$0xff] %vm795, %v672
    %947 = vst [vmem:[%s2 + $0x4c0] sm:$0xff] %v676
    %948 = vst.msk [vmem:[%s2 + $0x4c8] sm:$0xff] %vm795, %v678
    %949 = vst [vmem:[%s2 + $0x4d0] sm:$0xff] %v682
    %950 = vst.msk [vmem:[%s2 + $0x4d8] sm:$0xff] %vm795, %v684
    %951 = vst [vmem:[%s2 + $0x4e0] sm:$0xff] %v688
    %952 = vst.msk [vmem:[%s2 + $0x4e8] sm:$0xff] %vm795, %v690
    %953 = vst [vmem:[%s2 + $0x4f0] sm:$0xff] %v694
    %954 = vst.msk [vmem:[%s2 + $0x4f8] sm:$0xff] %vm795, %v696
    %955 = vst [vmem:[%s2 + $0x500] sm:$0xff] %v700
    %956 = vst.msk [vmem:[%s2 + $0x508] sm:$0xff] %vm795, %v702
    %957 = vst [vmem:[%s2 + $0x510] sm:$0xff] %v706
    %958 = vst.msk [vmem:[%s2 + $0x518] sm:$0xff] %vm795, %v708
    %959 = vst [vmem:[%s2 + $0x520] sm:$0xff] %v712
    %960 = vst.msk [vmem:[%s2 + $0x528] sm:$0xff] %vm795, %v714
    %961 = vst [vmem:[%s2 + $0x530] sm:$0xff] %v718
    %962 = vst.msk [vmem:[%s2 + $0x538] sm:$0xff] %vm795, %v720
    %963 = vst [vmem:[%s2 + $0x540] sm:$0xff] %v724
    %964 = vst.msk [vmem:[%s2 + $0x548] sm:$0xff] %vm795, %v726
    %965 = vst [vmem:[%s2 + $0x550] sm:$0xff] %v730
    %966 = vst.msk [vmem:[%s2 + $0x558] sm:$0xff] %vm795, %v732
    %967 = vst [vmem:[%s2 + $0x560] sm:$0xff] %v736
    %968 = vst.msk [vmem:[%s2 + $0x568] sm:$0xff] %vm795, %v738
    %969 = vst [vmem:[%s2 + $0x570] sm:$0xff] %v742
    %970 = vst.msk [vmem:[%s2 + $0x578] sm:$0xff] %vm795, %v744
    %971 = vst [vmem:[%s2 + $0x580] sm:$0xff] %v748
    %972 = vst.msk [vmem:[%s2 + $0x588] sm:$0xff] %vm795, %v750
    %973 = vst [vmem:[%s2 + $0x590] sm:$0xff] %v754
    %974 = vst.msk [vmem:[%s2 + $0x598] sm:$0xff] %vm795, %v756
    %975 = vst [vmem:[%s2 + $0x5a0] sm:$0xff] %v760
    %976 = vst.msk [vmem:[%s2 + $0x5a8] sm:$0xff] %vm795, %v762
    %977 = vst [vmem:[%s2 + $0x5b0] sm:$0xff] %v766
    %978 = vst.msk [vmem:[%s2 + $0x5b8] sm:$0xff] %vm795, %v768
    %979 = vst [vmem:[%s2 + $0x5c0] sm:$0xff] %v772
    %980 = vst.msk [vmem:[%s2 + $0x5c8] sm:$0xff] %vm795, %v774
    %981 = vst [vmem:[%s2 + $0x5d0] sm:$0xff] %v778
    %982 = vst.msk [vmem:[%s2 + $0x5d8] sm:$0xff] %vm795, %v780
    %983 = vst [vmem:[%s2 + $0x5e0] sm:$0xff] %v784
    %984 = vst.msk [vmem:[%s2 + $0x5e8] sm:$0xff] %vm795, %v786
    %985 = vst [vmem:[%s2 + $0x5f0] sm:$0xff] %v790
    %986 = vst.msk [vmem:[%s2 + $0x5f8] sm:$0xff] %vm795, %v792
    // Predicated region
    $region14: #{tpu_custom_call.1} parent=1 // pred_check
      _
    $region15: #{tpu_custom_call.1} parent=1 // pred_check_branch
      %988 = sbr.rel (0) target = $region17
    $region16: #{tpu_custom_call.1} parent=1 // pred_region
      _
    $region17: #{tpu_custom_call.1} parent=1 // pred_fallthru
      _
    // Predicated region
    $region18: #{tpu_custom_call.1} parent=1 // pred_check
      _
    $region19: #{tpu_custom_call.1} parent=1 // pred_check_branch
      %990 = sbr.rel (0) target = $region21
    $region20: #{tpu_custom_call.1} parent=1 // pred_region
      _
    $region21: #{tpu_custom_call.1} parent=1 // pred_fallthru
      _
    %991 = vsyncpa [#allocation3], 1

</llo_original>
